<compile_context>
chip_gen: v5e
topology: v5e:2x2
jax: 0.10.0
libtpu: 0.0.40
codegen_flags: <defaults>
</compile_context>

<pallas_src>
import functools
import math

import jax
import jax.numpy as jnp
from jax.experimental import pallas as pl
from jax.experimental.pallas import tpu as pltpu

_LANES = 128          # lane width of every packed slab / the fused output
_SLAB = 128           # rows per weight slab in the packed parameter buffer
_BIAS_ROWS = 8        # one (8,128) tile holding the three bias rows
_PACKED_ROWS = 3 * _SLAB + _BIAS_ROWS   # 392
_BATCH_TILE = 512     # batch tile for the parallel grid path


def _round_up(x, m):
    return (x + m - 1) // m * m


def _fused_mlp_kernel(state_ref, params_ref, out_ref, *, s_pad):
    """Whole forward pass, fused heads, one lane-dense output tile.

    params_ref layout (rows):
      [0, 128)   : W1  (rows 0..S-1 real, lanes 0..F1-1 real, rest 0)
      [128, 256) : W2  (rows 0..F1-1 real, lanes 0..F2-1 real, rest 0)
      [256, 384) : [Wvf | Wif] (rows 0..F2-1 real, lanes 0..n_vf+n_if-1 real)
      [384, 392) : row 0 = b1, row 1 = b2, row 2 = [bvf | bif], rest 0
    """
    x = state_ref[...]                                          # [tB, s_pad]

    bias = params_ref[3 * _SLAB:3 * _SLAB + _BIAS_ROWS, :]      # [8, 128]

    # fc1 + relu  (padded lanes: zero weight cols + zero bias -> exactly 0)
    w1 = params_ref[0:s_pad, :]                                 # [s_pad, 128]
    h1 = jnp.dot(x, w1, preferred_element_type=jnp.float32) + bias[0, :]
    h1 = jnp.maximum(h1, 0.0)                                   # [tB, 128]

    # fc2 + relu  (full 128-row slab; padded rows are 0 and h1 pad lanes are 0)
    w2 = params_ref[_SLAB:2 * _SLAB, :]                         # [128, 128]
    h2 = jnp.dot(h1, w2, preferred_element_type=jnp.float32) + bias[1, :]
    h2 = jnp.maximum(h2, 0.0)                                   # [tB, 128]

    # fused VF|IF heads -> single lane-dense [tB, 128] store
    wh = params_ref[2 * _SLAB:3 * _SLAB, :]                     # [128, 128]
    heads = jnp.dot(h2, wh, preferred_element_type=jnp.float32) + bias[2, :]

    out_ref[...] = heads.astype(out_ref.dtype)


def pack_params(params):
    """Pack all weights + biases into one [392, 128] f32 buffer (single DMA)."""
    w1, b1 = params["w1"], params["b1"]
    w2, b2 = params["w2"], params["b2"]
    wh = jnp.concatenate([params["wvf"], params["wif"]], axis=1)   # fused heads
    bh = jnp.concatenate([params["bvf"], params["bif"]], axis=1)

    S, F1 = w1.shape
    F2 = w2.shape[1]
    n_heads = wh.shape[1]
    assert S <= _SLAB and F1 <= _LANES and F1 <= _SLAB, "fc1 too wide for packing"
    assert F2 <= _LANES and F2 <= _SLAB, "fc2 too wide for packing"
    assert n_heads <= _LANES, "fused heads too wide for packing"

    buf = jnp.zeros((_PACKED_ROWS, _LANES), jnp.float32)
    buf = buf.at[0:S, 0:F1].set(w1)
    buf = buf.at[_SLAB:_SLAB + F1, 0:F2].set(w2)
    buf = buf.at[2 * _SLAB:2 * _SLAB + F2, 0:n_heads].set(wh)
    buf = buf.at[3 * _SLAB, 0:F1].set(b1[0])
    buf = buf.at[3 * _SLAB + 1, 0:F2].set(b2[0])
    buf = buf.at[3 * _SLAB + 2, 0:n_heads].set(bh[0])
    return buf


def vectorization_forward(state, packed_params, n_vf, n_if):
    """Runs the fused kernel; returns (vf_out, if_out)."""
    B, S = state.shape
    s_pad = _round_up(S, 8)
    if s_pad != S:
        state = jnp.pad(state, ((0, 0), (0, s_pad - S)))

    # Batch tiling: single grid step for small batches; 512-row parallel tiles
    # otherwise (weights stay VMEM-resident via the constant index_map).
    if B <= _BATCH_TILE:
        tB, grid = B, (1,)
    else:
        tB, grid = _BATCH_TILE, (pl.cdiv(B, _BATCH_TILE),)

    out = pl.pallas_call(
        functools.partial(_fused_mlp_kernel, s_pad=s_pad),
        out_shape=jax.ShapeDtypeStruct((B, _LANES), jnp.float32),
        grid=grid,
        in_specs=[
            pl.BlockSpec((tB, s_pad), lambda i: (i, 0)),
            pl.BlockSpec((_PACKED_ROWS, _LANES), lambda i: (0, 0)),
        ],
        out_specs=pl.BlockSpec((tB, _LANES), lambda i: (i, 0)),
        compiler_params=pltpu.CompilerParams(
            dimension_semantics=("parallel",)),
    )(state, packed_params)

    return out[:, :n_vf], out[:, n_vf:n_vf + n_if]


def init_params(key, state_size, fc1_units, fc2_units, n_vf, n_if):
    """PyTorch nn.Linear-style init; weights stored as [in, out], biases [1, out]."""
    def linear(key, fan_in, fan_out):
        kw, kb = jax.random.split(key)
        bound = 1.0 / math.sqrt(fan_in)
        w = jax.random.uniform(kw, (fan_in, fan_out), jnp.float32, -bound, bound)
        b = jax.random.uniform(kb, (1, fan_out), jnp.float32, -bound, bound)
        return w, b

    k1, k2, k3, k4 = jax.random.split(key, 4)
    w1, b1 = linear(k1, state_size, fc1_units)
    w2, b2 = linear(k2, fc1_units, fc2_units)
    wvf, bvf = linear(k3, fc2_units, n_vf)
    wif, bif = linear(k4, fc2_units, n_if)
    return {
        "w1": w1, "b1": b1,
        "w2": w2, "b2": b2,
        "wvf": wvf, "bvf": bvf,
        "wif": wif, "bif": bif,
    }


if __name__ == "__main__":
    # state_size=32, fc1_units=64, fc2_units=32, |action_space_VF|=8,
    # |action_space_IF|=8, batch=8.
    B, S, F1, F2, N_VF, N_IF = 8, 32, 64, 32, 8, 8

    key = jax.random.PRNGKey(0)
    k_state, k_params = jax.random.split(key)

    state = jax.random.normal(k_state, (B, S), dtype=jnp.float32)
    params = init_params(k_params, S, F1, F2, N_VF, N_IF)
    packed = pack_params(params)   # pack once; reuse across calls in real use

    vf_out, if_out = vectorization_forward(state, packed, N_VF, N_IF)
    jax.block_until_ready((vf_out, if_out))

    # Pure-JAX reference check (same math, outside Pallas).
    h1 = jnp.maximum(state @ params["w1"] + params["b1"], 0.0)
    h2 = jnp.maximum(h1 @ params["w2"] + params["b2"], 0.0)
    vf_ref = h2 @ params["wvf"] + params["bvf"]
    if_ref = h2 @ params["wif"] + params["bif"]
    assert vf_out.shape == (B, N_VF) and if_out.shape == (B, N_IF)
    assert jnp.allclose(vf_out, vf_ref, atol=1e-5), "VF head mismatch"
    assert jnp.allclose(if_out, if_ref, atol=1e-5), "IF head mismatch"

    print("KERNEL_OK")
</pallas_src>

<mosaic_0001>
module attributes {stable_mosaic.version = 11 : i64} {
  func.func @_fused_mlp_kernel(%arg0: i32, %arg1: memref<8x32xf32, #tpu.memory_space<vmem>>, %arg2: memref<392x128xf32, #tpu.memory_space<vmem>>, %arg3: memref<8x128xf32, #tpu.memory_space<vmem>>) attributes {dimension_semantics = [#tpu.dimension_semantics<parallel>], iteration_bounds = array<i64: 1>, scalar_prefetch = 0 : i64, scratch_operands = 0 : i64, tpu.core_type = #tpu.core_type<tc>, window_params = [{transform_indices = @transform_0, window_bounds = array<i64: 8, 32>}, {pipeline_mode = #tpu.pipeline_mode<synchronous>, transform_indices = @transform_1, window_bounds = array<i64: 392, 128>}, {transform_indices = @transform_2, window_bounds = array<i64: 8, 128>}]} {
    %c0 = arith.constant 0 : index
    %c0_0 = arith.constant 0 : index
    %0 = vector.load %arg1[%c0, %c0_0] : memref<8x32xf32, #tpu.memory_space<vmem>>, vector<8x32xf32>
    %c384 = arith.constant 384 : index
    %c0_1 = arith.constant 0 : index
    %1 = vector.load %arg2[%c384, %c0_1] : memref<392x128xf32, #tpu.memory_space<vmem>>, vector<8x128xf32>
    %c0_2 = arith.constant 0 : index
    %c0_3 = arith.constant 0 : index
    %2 = vector.load %arg2[%c0_2, %c0_3] : memref<392x128xf32, #tpu.memory_space<vmem>>, vector<32x128xf32>
    %cst = arith.constant dense<0.000000e+00> : vector<8x128xf32>
    %3 = tpu.matmul %0, %2, %cst {dimension_numbers = #tpu.dot_dimension_numbers<[1], [0], [0], [1], [0, 0, 1, 1], [], []>} : vector<8x32xf32>, vector<32x128xf32>, vector<8x128xf32> -> vector<8x128xf32>
    %4 = vector.extract_strided_slice %1 {offsets = [0, 0], sizes = [1, 128], strides = [1, 1]} : vector<8x128xf32> to vector<1x128xf32>
    %5 = vector.shape_cast %4 : vector<1x128xf32> to vector<128xf32>
    %6 = vector.shape_cast %5 : vector<128xf32> to vector<1x128xf32>
    %7 = vector.broadcast %6 : vector<1x128xf32> to vector<8x128xf32>
    %8 = arith.addf %3, %7 : vector<8x128xf32>
    %cst_4 = arith.constant 0.000000e+00 : f32
    %9 = vector.broadcast %cst_4 : f32 to vector<8x128xf32>
    %10 = arith.maximumf %8, %9 : vector<8x128xf32>
    %c128 = arith.constant 128 : index
    %c0_5 = arith.constant 0 : index
    %11 = vector.load %arg2[%c128, %c0_5] : memref<392x128xf32, #tpu.memory_space<vmem>>, vector<128x128xf32>
    %cst_6 = arith.constant dense<0.000000e+00> : vector<8x128xf32>
    %12 = tpu.matmul %10, %11, %cst_6 {dimension_numbers = #tpu.dot_dimension_numbers<[1], [0], [0], [1], [0, 0, 1, 1], [], []>} : vector<8x128xf32>, vector<128x128xf32>, vector<8x128xf32> -> vector<8x128xf32>
    %13 = vector.extract_strided_slice %1 {offsets = [1, 0], sizes = [1, 128], strides = [1, 1]} : vector<8x128xf32> to vector<1x128xf32>
    %14 = vector.shape_cast %13 : vector<1x128xf32> to vector<128xf32>
    %15 = vector.shape_cast %14 : vector<128xf32> to vector<1x128xf32>
    %16 = vector.broadcast %15 : vector<1x128xf32> to vector<8x128xf32>
    %17 = arith.addf %12, %16 : vector<8x128xf32>
    %cst_7 = arith.constant 0.000000e+00 : f32
    %18 = vector.broadcast %cst_7 : f32 to vector<8x128xf32>
    %19 = arith.maximumf %17, %18 : vector<8x128xf32>
    %c256 = arith.constant 256 : index
    %c0_8 = arith.constant 0 : index
    %20 = vector.load %arg2[%c256, %c0_8] : memref<392x128xf32, #tpu.memory_space<vmem>>, vector<128x128xf32>
    %cst_9 = arith.constant dense<0.000000e+00> : vector<8x128xf32>
    %21 = tpu.matmul %19, %20, %cst_9 {dimension_numbers = #tpu.dot_dimension_numbers<[1], [0], [0], [1], [0, 0, 1, 1], [], []>} : vector<8x128xf32>, vector<128x128xf32>, vector<8x128xf32> -> vector<8x128xf32>
    %22 = vector.extract_strided_slice %1 {offsets = [2, 0], sizes = [1, 128], strides = [1, 1]} : vector<8x128xf32> to vector<1x128xf32>
    %23 = vector.shape_cast %22 : vector<1x128xf32> to vector<128xf32>
    %24 = vector.shape_cast %23 : vector<128xf32> to vector<1x128xf32>
    %25 = vector.broadcast %24 : vector<1x128xf32> to vector<8x128xf32>
    %26 = arith.addf %21, %25 : vector<8x128xf32>
    %c0_10 = arith.constant 0 : index
    %c0_11 = arith.constant 0 : index
    %27 = vector.load %arg3[%c0_10, %c0_11] : memref<8x128xf32, #tpu.memory_space<vmem>>, vector<8x128xf32>
    tpu.vector_store %arg3[%c0_10, %c0_11], %26 {strides = array<i32>} : memref<8x128xf32, #tpu.memory_space<vmem>>, vector<8x128xf32>,
    return
  }
  func.func @transform_0(%arg0: i32) -> (i32, i32) {
    %c0_i32 = arith.constant 0 : i32
    %c0_i32_0 = arith.constant 0 : i32
    return %arg0, %c0_i32 : i32, i32
  }
  func.func @transform_1(%arg0: i32) -> (i32, i32) {
    %c0_i32 = arith.constant 0 : i32
    %c0_i32_0 = arith.constant 0 : i32
    %c0_i32_1 = arith.constant 0 : i32
    return %c0_i32, %c0_i32_0 : i32, i32
  }
  func.func @transform_2(%arg0: i32) -> (i32, i32) {
    %c0_i32 = arith.constant 0 : i32
    %c0_i32_0 = arith.constant 0 : i32
    return %arg0, %c0_i32 : i32, i32
  }
}

</mosaic_0001>

<llo_original>
// kernel: tpu_custom_call.1
$region0: #{tpu_custom_call.1}
  #allocation0 [shape = 'u32[]', space=smem, size = 0x4, offset = 0x4, fixed_abs, tag = 'smem constant byte address 0x4 - core index']
  #allocation1 [shape = 'u32[72,128]{1,0:T(1,128)}', space=vmem, size = 0x9000, scoped, tag = 'internal scratch']
  %s0 = inlined_call_operand.hbm [shape: f32[8,32], index: 0, kind: input, shape index: {}]
  %s1 = inlined_call_operand.hbm [shape: f32[392,128], index: 1, kind: input, shape index: {}]
  %s2 = inlined_call_operand.hbm [shape: f32[8,128], index: 2, kind: output, shape index: {}]
  %s3 = sld [smem:[#allocation0]]
  $region26: #{tpu_custom_call.1} parent=0
    _
  %s5 = ssub.s32 1, %s3
  %s6 = scalar_select 0, %s5, %s3
  $region1: #{tpu_custom_call.1} parent=0
    #allocation2 [shape = 'u8[4096]{0}', space=vmem, size = 0x1000, scoped, tag = 'input window, operand 0, single buffered']
    #allocation3 [shape = 's32[1]{0}', space=sflag, size = 0x4, scoped, tag = 'scoped memory for tpu_custom_call.1']
    #allocation4 [shape = 's32[1]{0}', space=sflag, size = 0x4, scoped, tag = 'scoped memory for tpu_custom_call.1']
    #allocation5 [shape = 'u8[200704]{0}', space=vmem, size = 0x31000, scoped, tag = 'input window, operand 1, single buffered']
    #allocation6 [shape = 's32[1]{0}', space=sflag, size = 0x4, scoped, tag = 'scoped memory for tpu_custom_call.1']
    #allocation7 [shape = 'u8[4096]{0}', space=vmem, size = 0x1000, scoped, tag = 'output window, operand 0, single buffered']
    %7 = vsyncpa [#allocation3], 0
    %8 = vsyncpa [#allocation6], 0
    %9 = vsyncpa [#allocation4], 0
    // Predicated region
    $region2: #{tpu_custom_call.1} parent=1 // pred_check
      _
    $region3: #{tpu_custom_call.1} parent=1 // pred_check_branch
      %11 = sbr.rel (0) target = $region5
    $region4: #{tpu_custom_call.1} parent=1 // pred_region
      %13 = vsyncadd [#allocation3], 0
      %s15 = sshll.u32 %s0, 4
      %s16 = int_to_ptr.hbm [resolvable:$true] %s15
      %s17 = sshll.u32 [#allocation2], 4
      %s18 = int_to_ptr.vmem [resolvable:$true] %s17
      %20 = dma.hbm_to_vmem [thread:$0]  %s16, 128, %s18, [#allocation3]
    $region5: #{tpu_custom_call.1} parent=1 // pred_fallthru
      _
    // Predicated region
    $region6: #{tpu_custom_call.1} parent=1 // pred_check
      _
    $region7: #{tpu_custom_call.1} parent=1 // pred_check_branch
      %22 = sbr.rel (0) target = $region9
    $region8: #{tpu_custom_call.1} parent=1 // pred_region
      %24 = vsyncadd [#allocation6], 0
      %s25 = sshll.u32 %s1, 4
      %s26 = int_to_ptr.hbm [resolvable:$true] %s25
      %s27 = sshll.u32 [#allocation5], 4
      %s28 = int_to_ptr.vmem [resolvable:$true] %s27
      %33 = dma.hbm_to_vmem [thread:$0]  %s26, 6272, %s28, [#allocation6], 128, 128, 8
    $region9: #{tpu_custom_call.1} parent=1 // pred_fallthru
      _
    // Predicated region
    $region10: #{tpu_custom_call.1} parent=1 // pred_check
      _
    $region11: #{tpu_custom_call.1} parent=1 // pred_check_branch
      %35 = sbr.rel (0) target = $region13
    $region12: #{tpu_custom_call.1} parent=1 // pred_region
      %37 = dma.done [#allocation3], 128
    $region13: #{tpu_custom_call.1} parent=1 // pred_fallthru
      _
    // Predicated region
    $region14: #{tpu_custom_call.1} parent=1 // pred_check
      _
    $region15: #{tpu_custom_call.1} parent=1 // pred_check_branch
      %39 = sbr.rel (0) target = $region17
    $region16: #{tpu_custom_call.1} parent=1 // pred_region
      %41 = dma.done [#allocation6], 6272
    $region17: #{tpu_custom_call.1} parent=1 // pred_fallthru
      _
    %v42 = vld [vmem:[#allocation2] sm:$0xff]
    %v43 = vld [vmem:[#allocation5 + $0x180] sm:$0xff]
    %v44 = vld [vmem:[#allocation5] sm:$0xff]
    %v45 = vld [vmem:[#allocation5 + $0x8] sm:$0xff]
    %v46 = vld [vmem:[#allocation5 + $0x10] sm:$0xff]
    %v47 = vld [vmem:[#allocation5 + $0x18] sm:$0xff]
    %v48 = vperm.slane %v43, 0
    %vm49 = vcmask 261120
    %v51 = vsel %vm49, %v42, 0
    %53 = vmatpush.msra.mxu0 0.0
    %54 = vmatpush.msra.mxu0 0.0
    %55 = vmatpush.msra.mxu0 0.0
    %56 = vmatpush.msra.mxu0 0.0
    %57 = vmatpush.msra.mxu0 0.0
    %58 = vmatpush.msra.mxu0 0.0
    %59 = vmatpush.msra.mxu0 0.0
    %60 = vmatpush.msra.mxu0 0.0
    %61 = vmatpush.msra.mxu0 0.0
    %62 = vmatpush.msra.mxu0 0.0
    %63 = vmatpush.msra.mxu0 0.0
    %64 = vmatpush.msra.mxu0 0.0
    %65 = vmatpush.msra.mxu0 %v47
    %66 = vmatpush.msra.mxu0 %v46
    %67 = vmatpush.msra.mxu0 %v45
    %68 = vmatpush.msra.mxu0 %v44
    %69 = vmatmul.f32.gmra.mxu0 %v51
    %v70 = vpop.f32.mrf.mxu0
    %v71 = vadd.f32 %v48, %v70
    %72 = vdwg.mxu0
    %v73 = vmax.f32 %v71, 0.0
    %v74 = vld [vmem:[#allocation5 + $0x80] sm:$0xff]
    %v75 = vld [vmem:[#allocation5 + $0x88] sm:$0xff]
    %v76 = vld [vmem:[#allocation5 + $0x90] sm:$0xff]
    %v77 = vld [vmem:[#allocation5 + $0x98] sm:$0xff]
    %v78 = vld [vmem:[#allocation5 + $0xa0] sm:$0xff]
    %v79 = vld [vmem:[#allocation5 + $0xa8] sm:$0xff]
    %v80 = vld [vmem:[#allocation5 + $0xb0] sm:$0xff]
    %v81 = vld [vmem:[#allocation5 + $0xb8] sm:$0xff]
    %v82 = vld [vmem:[#allocation5 + $0xc0] sm:$0xff]
    %v83 = vld [vmem:[#allocation5 + $0xc8] sm:$0xff]
    %v84 = vld [vmem:[#allocation5 + $0xd0] sm:$0xff]
    %v85 = vld [vmem:[#allocation5 + $0xd8] sm:$0xff]
    %v86 = vld [vmem:[#allocation5 + $0xe0] sm:$0xff]
    %v87 = vld [vmem:[#allocation5 + $0xe8] sm:$0xff]
    %v88 = vld [vmem:[#allocation5 + $0xf0] sm:$0xff]
    %v89 = vld [vmem:[#allocation5 + $0xf8] sm:$0xff]
    %v90 = vperm.slane %v43, 1
    %91 = vmatpush.msra.mxu0 %v89
    %92 = vmatpush.msra.mxu0 %v88
    %93 = vmatpush.msra.mxu0 %v87
    %94 = vmatpush.msra.mxu0 %v86
    %95 = vmatpush.msra.mxu0 %v85
    %96 = vmatpush.msra.mxu0 %v84
    %97 = vmatpush.msra.mxu0 %v83
    %98 = vmatpush.msra.mxu0 %v82
    %99 = vmatpush.msra.mxu0 %v81
    %100 = vmatpush.msra.mxu0 %v80
    %101 = vmatpush.msra.mxu0 %v79
    %102 = vmatpush.msra.mxu0 %v78
    %103 = vmatpush.msra.mxu0 %v77
    %104 = vmatpush.msra.mxu0 %v76
    %105 = vmatpush.msra.mxu0 %v75
    %106 = vmatpush.msra.mxu0 %v74
    %107 = vmatmul.f32.gmra.mxu0 %v73
    %v108 = vpop.f32.mrf.mxu0
    %v109 = vadd.f32 %v90, %v108
    %110 = vdwg.mxu0
    %v111 = vmax.f32 %v109, 0.0
    %v112 = vld [vmem:[#allocation5 + $0x100] sm:$0xff]
    %v113 = vld [vmem:[#allocation5 + $0x108] sm:$0xff]
    %v114 = vld [vmem:[#allocation5 + $0x110] sm:$0xff]
    %v115 = vld [vmem:[#allocation5 + $0x118] sm:$0xff]
    %v116 = vld [vmem:[#allocation5 + $0x120] sm:$0xff]
    %v117 = vld [vmem:[#allocation5 + $0x128] sm:$0xff]
    %v118 = vld [vmem:[#allocation5 + $0x130] sm:$0xff]
    %v119 = vld [vmem:[#allocation5 + $0x138] sm:$0xff]
    %v120 = vld [vmem:[#allocation5 + $0x140] sm:$0xff]
    %v121 = vld [vmem:[#allocation5 + $0x148] sm:$0xff]
    %v122 = vld [vmem:[#allocation5 + $0x150] sm:$0xff]
    %v123 = vld [vmem:[#allocation5 + $0x158] sm:$0xff]
    %v124 = vld [vmem:[#allocation5 + $0x160] sm:$0xff]
    %v125 = vld [vmem:[#allocation5 + $0x168] sm:$0xff]
    %v126 = vld [vmem:[#allocation5 + $0x170] sm:$0xff]
    %v127 = vld [vmem:[#allocation5 + $0x178] sm:$0xff]
    %v128 = vperm.slane %v43, 2
    %129 = vmatpush.msra.mxu0 %v127
    %130 = vmatpush.msra.mxu0 %v126
    %131 = vmatpush.msra.mxu0 %v125
    %132 = vmatpush.msra.mxu0 %v124
    %133 = vmatpush.msra.mxu0 %v123
    %134 = vmatpush.msra.mxu0 %v122
    %135 = vmatpush.msra.mxu0 %v121
    %136 = vmatpush.msra.mxu0 %v120
    %137 = vmatpush.msra.mxu0 %v119
    %138 = vmatpush.msra.mxu0 %v118
    %139 = vmatpush.msra.mxu0 %v117
    %140 = vmatpush.msra.mxu0 %v116
    %141 = vmatpush.msra.mxu0 %v115
    %142 = vmatpush.msra.mxu0 %v114
    %143 = vmatpush.msra.mxu0 %v113
    %144 = vmatpush.msra.mxu0 %v112
    %145 = vmatmul.f32.gmra.mxu0 %v111
    %v146 = vpop.f32.mrf.mxu0
    %v147 = vadd.f32 %v128, %v146
    %148 = vdwg.mxu0
    %149 = vst [vmem:[#allocation7] sm:$0xff] %v147
    // Predicated region
    $region18: #{tpu_custom_call.1} parent=1 // pred_check
      _
    $region19: #{tpu_custom_call.1} parent=1 // pred_check_branch
      %151 = sbr.rel (0) target = $region21
    $region20: #{tpu_custom_call.1} parent=1 // pred_region
      %153 = vsyncadd [#allocation4], 0
      %s155 = sshll.u32 [#allocation7], 4
      %s156 = int_to_ptr.vmem [resolvable:$true] %s155
      %s157 = sshll.u32 %s2, 4
      %s158 = int_to_ptr.hbm [resolvable:$true] %s157
      %160 = dma.vmem_to_hbm [thread:$0]  %s156, 128, %s158, [#allocation4]
    $region21: #{tpu_custom_call.1} parent=1 // pred_fallthru
      _
    // Predicated region
    $region22: #{tpu_custom_call.1} parent=1 // pred_check
      _
    $region23: #{tpu_custom_call.1} parent=1 // pred_check_branch
      %162 = sbr.rel (0) target = $region25
    $region24: #{tpu_custom_call.1} parent=1 // pred_region
      %164 = dma.done [#allocation4], 128
    $region25: #{tpu_custom_call.1} parent=1 // pred_fallthru
      _
    %165 = vsyncpa [#allocation3], 1
    %166 = vsyncpa [#allocation6], 1
    %167 = vsyncpa [#allocation4], 1

</llo_original>
